<compile_context>
chip_gen: v6e
topology: v6e:2x2x1
jax: 0.10.0
libtpu: 0.0.40
codegen_flags: <defaults>
</compile_context>

<pallas_src>
import numpy as np
import jax
import jax.numpy as jnp
from jax.experimental import pallas as pl
from jax.experimental.pallas import tpu as pltpu

IS = 32      # hidden size (iS)
NH = 128     # lane-dense fused-head width (all head outputs padded to 128)


# ---------------------------------------------------------------------------
# Pallas kernels
# ---------------------------------------------------------------------------

def _fused_heads_kernel(x_ref, w_ref, b_ref, sig_ref, o_ref):
    """out = select(sig, sigmoid(x@W+b), x@W+b) -- one wide MXU matmul."""
    z = (jnp.dot(x_ref[...], w_ref[...], preferred_element_type=jnp.float32)
         + b_ref[...])
    o_ref[...] = jnp.where(sig_ref[...] > 0.5, jax.nn.sigmoid(z), z)


def fused_heads(x2d, w, b, sig, *, tile_m=512):
    """Apply every fused Linear head to an (M, K) row batch in one launch.

    Output width is padded to NH=128 so the store is a full, unmasked
    128-lane write; callers slice the head columns they need on the host.
    The M axis is tiled and marked 'parallel' (megacore / v7x friendly).
    """
    M, K = x2d.shape
    N = w.shape[1]
    Mp = ((M + 7) // 8) * 8                    # sublane-align row count
    if Mp != M:
        x2d = jnp.pad(x2d, ((0, Mp - M), (0, 0)))
    tm = min(tile_m, Mp)
    out = pl.pallas_call(
        _fused_heads_kernel,
        out_shape=jax.ShapeDtypeStruct((Mp, N), jnp.float32),
        grid=(pl.cdiv(Mp, tm),),
        in_specs=[
            pl.BlockSpec((tm, K), lambda i: (i, 0)),
            pl.BlockSpec((K, N), lambda i: (0, 0)),
            pl.BlockSpec((1, N), lambda i: (0, 0)),
            pl.BlockSpec((1, N), lambda i: (0, 0)),
        ],
        out_specs=pl.BlockSpec((tm, N), lambda i: (i, 0)),
        compiler_params=pltpu.CompilerParams(
            dimension_semantics=("parallel",)),
    )(x2d, w, b.reshape(1, N), sig.reshape(1, N))
    return out[:M]


def _col_repr_kernel(hpu_ref, cls_ref, mask_ref, wq_ref, bq_ref, wct_ref,
                     bc_ref, wh_ref, bh_ref, sig_ref, o_ref):
    """column_tok_ff + cls_ff + attention + residual + per-column heads."""
    hpu = hpu_ref[...]                    # (T, L, D) column sub-token embeddings
    cls_raw = cls_ref[...]                # (T, D)    [CLS] embedding per column
    # cls_ff projection (MXU)
    cls_q = (jnp.dot(cls_raw, wq_ref[...], preferred_element_type=jnp.float32)
             + bq_ref[...])                                            # (T, D)
    # column_tok_ff folded through the bilinear form:
    #   logits[t,l] = (hpu[t,l] @ Wc + bc) . cls_q[t]
    #              =  hpu[t,l] . (cls_q[t] @ Wc^T) + cls_q[t] . bc
    u = jnp.dot(cls_q, wct_ref[...], preferred_element_type=jnp.float32)  # (T, D)
    c0 = jnp.sum(cls_q * bc_ref[...], axis=-1, keepdims=True)             # (T, 1)
    logits = (jnp.sum(hpu * u[:, None, :], axis=-1) + c0) * mask_ref[...]  # (T, L)
    # reference semantics: normalize by raw masked logit sum (not softmax)
    denom = jnp.sum(logits, axis=-1, keepdims=True)
    attn = logits * pl.reciprocal(denom, approx=True)                     # (T, L)
    col_emb = jnp.sum(hpu * attn[:, :, None], axis=1) + cls_raw           # (T, D)
    # fused per-column output head: Wh = [I_D | w_select_col | w_where_col | 0]
    z = (jnp.dot(col_emb, wh_ref[...], preferred_element_type=jnp.float32)
         + bh_ref[...])                                                   # (T, NH)
    o_ref[...] = jnp.where(sig_ref[...] > 0.5, jax.nn.sigmoid(z), z)


def col_representation_call(wemb_hpu, cls_ex, hpu_mask, f):
    T, L, D = wemb_hpu.shape
    # TODO(synk): at production T, tile the T axis ('parallel') instead of a
    # single full-array block.
    return pl.pallas_call(
        _col_repr_kernel,
        out_shape=jax.ShapeDtypeStruct((T, NH), jnp.float32),
        grid=(1,),
        in_specs=[
            pl.BlockSpec((T, L, D), lambda i: (0, 0, 0)),
            pl.BlockSpec((T, D), lambda i: (0, 0)),
            pl.BlockSpec((T, L), lambda i: (0, 0)),
            pl.BlockSpec((D, D), lambda i: (0, 0)),
            pl.BlockSpec((1, D), lambda i: (0, 0)),
            pl.BlockSpec((D, D), lambda i: (0, 0)),
            pl.BlockSpec((1, D), lambda i: (0, 0)),
            pl.BlockSpec((D, NH), lambda i: (0, 0)),
            pl.BlockSpec((1, NH), lambda i: (0, 0)),
            pl.BlockSpec((1, NH), lambda i: (0, 0)),
        ],
        out_specs=pl.BlockSpec((T, NH), lambda i: (0, 0)),
    )(wemb_hpu, cls_ex, hpu_mask,
      f["Wq"], f["bq"].reshape(1, D), f["WcT"], f["bc"].reshape(1, D),
      f["Wh"], f["bh"].reshape(1, NH), f["sh"].reshape(1, NH))


def _match_kernel(c_ref, v_ref, w_ref, b_ref, cm_ref, vm_ref, o_ref):
    c = c_ref[...]                                    # (B, C, D) match_col_ff out
    v = v_ref[...]                                    # (B, V, D) match_nlu_ff out
    # TODO(synk): at production C*V*D, loop over V (lax.fori_loop, unroll=True)
    # instead of materializing the 4-D broadcast.
    t = jnp.tanh(c[:, :, None, :] + v[:, None, :, :])            # (B, C, V, D)
    z = jnp.sum(t * w_ref[...][None, None, :, :], axis=-1) + b_ref[...]
    o_ref[...] = (jax.nn.sigmoid(z)
                  * cm_ref[...][:, :, None] * vm_ref[...][:, None, :])


def pallas_cv_match(cols_m, vals_m, W, b, col_mask, val_mask):
    B, C, D = cols_m.shape
    V = vals_m.shape[1]
    return pl.pallas_call(
        _match_kernel,
        out_shape=jax.ShapeDtypeStruct((B, C, V), jnp.float32),
        grid=(1,),
        in_specs=[
            pl.BlockSpec((B, C, D), lambda i: (0, 0, 0)),
            pl.BlockSpec((B, V, D), lambda i: (0, 0, 0)),
            pl.BlockSpec((1, D), lambda i: (0, 0)),
            pl.BlockSpec((1, 1), lambda i: (0, 0)),
            pl.BlockSpec((B, C), lambda i: (0, 0)),
            pl.BlockSpec((B, V), lambda i: (0, 0)),
        ],
        out_specs=pl.BlockSpec((B, C, V), lambda i: (0, 0, 0)),
    )(cols_m, vals_m, W.reshape(1, D), b.reshape(1, 1), col_mask, val_mask)


# ---------------------------------------------------------------------------
# Parameters
# ---------------------------------------------------------------------------

def init_params(seed=0):
    key = jax.random.PRNGKey(seed)
    dims = {
        "cls_ff": (IS, IS),
        "column_tok_ff": (IS, IS),
        "W_select_num": (IS, 1),
        "W_where_num_op": (IS, 7),
        "W_select_col": (IS, 1),
        "W_where_col": (IS, 1),
        "W_select_agg": (IS, 6),
        "W_where_op": (IS, 4),
        "W_col_label": (IS, 1),
        "match_nlu_ff": (IS, IS),
        "match_col_ff": (IS, IS),
        "W_cv_match": (IS, 1),
    }
    params = {}
    for name, (din, dout) in dims.items():
        key, k1, k2 = jax.random.split(key, 3)
        W = jax.random.normal(k1, (din, dout), jnp.float32) * 0.1
        b = jax.random.normal(k2, (dout,), jnp.float32) * 0.1
        params[name] = (W, b)
    return params


def build_fused_params(params):
    """Pack per-head (W, b) pairs into lane-dense fused weight matrices."""
    D = IS
    f = {}
    # ---- col-representation kernel weights ---------------------------------
    f["Wq"], f["bq"] = params["cls_ff"]
    Wc, bc = params["column_tok_ff"]
    f["WcT"] = jnp.transpose(Wc)
    f["bc"] = bc
    # fused per-column output head: [identity(D) | W_select_col | W_where_col | 0]
    Wh = np.zeros((D, NH), np.float32)
    bh = np.zeros((NH,), np.float32)
    sh = np.zeros((NH,), np.float32)
    Wh[:, :D] = np.eye(D, dtype=np.float32)
    for j, name in ((D, "W_select_col"), (D + 1, "W_where_col")):
        W, b = params[name]
        Wh[:, j] = np.asarray(W)[:, 0]
        bh[j] = np.asarray(b)[0]
        sh[j] = 1.0
    f["Wh"], f["bh"], f["sh"] = jnp.asarray(Wh), jnp.asarray(bh), jnp.asarray(sh)
    f["col_emb_sl"] = (0, D)
    f["sc_col"] = D
    f["wc_col"] = D + 1
    # ---- one fused head bank for every remaining Linear --------------------
    Wt = np.zeros((D, NH), np.float32)
    bt = np.zeros((NH,), np.float32)
    st = np.zeros((NH,), np.float32)
    slices = {}
    col = 0
    for key_, name, sig in (("sn", "W_select_num", True),
                            ("wnop", "W_where_num_op", False),
                            ("sa", "W_select_agg", False),
                            ("wo", "W_where_op", False),
                            ("tag", "W_col_label", True),
                            ("mcol", "match_col_ff", False),
                            ("mval", "match_nlu_ff", False)):
        W, b = params[name]
        W = np.asarray(W)
        b = np.asarray(b)
        n = W.shape[1]
        Wt[:, col:col + n] = W
        bt[col:col + n] = b
        if sig:
            st[col:col + n] = 1.0
        slices[key_] = (col, col + n)
        col += n
    assert col <= NH
    f["Wt"], f["bt"], f["st"] = jnp.asarray(Wt), jnp.asarray(bt), jnp.asarray(st)
    f["slices"] = slices
    return f


# ---------------------------------------------------------------------------
# Host-side bookkeeping (vectorized; mirrors the reference Python-list logic)
# ---------------------------------------------------------------------------

# synthetic wnop -> (conn_op, where_num) map; where_num <= 3
WNOP_MAP_REVERSE = {0: (0, 0), 1: (0, 1), 2: (1, 2), 3: (2, 2),
                    4: (1, 3), 5: (2, 3), 6: (1, 1)}


def extract_val(tags, l_n):
    """Contiguous runs of tag==1 within the first l_n[b] tokens."""
    spans_all, nums = [], []
    for b, l in enumerate(l_n):
        t = list(tags[b])[:l]
        spans, i = [], 0
        while i < l:
            if t[i] == 1:
                j = i
                while j + 1 < l and t[j + 1] == 1:
                    j += 1
                spans.append((i, j))
                i = j + 1
            else:
                i += 1
        spans_all.append(spans)
        nums.append(len(spans))
    return spans_all, nums


def length_mask(lengths, max_len):
    return (np.arange(max_len)[None, :]
            < np.asarray(lengths)[:, None]).astype(np.float32)


def pad_list(sequences, l_n):
    max_len = max(l_n)
    return np.array([list(s) + [0] * (max_len - l_n[b])
                     for b, s in enumerate(sequences)], np.int32)


def get_columns_representation(fused, wemb_cls, wemb_hpu, l_hpu, l_hs):
    """Fused column attention + per-column heads; one gather packs per batch."""
    T, L, D = wemb_hpu.shape
    bS = wemb_cls.shape[0]
    assert T == sum(l_hs)
    rep_idx = np.repeat(np.arange(bS, dtype=np.int32), np.asarray(l_hs))
    cls_ex = wemb_cls[jnp.asarray(rep_idx)]                        # (T, D)
    hpu_mask = jnp.asarray(length_mask(l_hpu, L))                  # (T, L)
    out = col_representation_call(wemb_hpu, cls_ex, hpu_mask, fused)  # (T, NH)

    max_col = max(l_hs)
    ends = np.cumsum(np.asarray(l_hs, np.int64))
    starts = (ends - np.asarray(l_hs, np.int64)).astype(np.int32)
    gidx = np.minimum(
        starts[:, None] + np.arange(max_col, dtype=np.int32)[None, :], T - 1)
    col_mask = jnp.asarray(length_mask(l_hs, max_col))             # (bS, maxC)
    packed = out[jnp.asarray(gidx)]                                # (bS, maxC, NH)
    lo, hi = fused["col_emb_sl"]
    cols_emb = packed[:, :, lo:hi] * col_mask[:, :, None]
    s_sc = packed[:, :, fused["sc_col"]] * col_mask
    s_wc = packed[:, :, fused["wc_col"]] * col_mask
    return cols_emb, col_mask, s_sc, s_wc


def get_sub_columns(cols_emb, index, nums, max_num=-1):
    max_num = max(nums) if max_num == -1 else max_num
    bS = cols_emb.shape[0]
    idx = np.zeros((bS, max_num), np.int32)        # pad == column 0 (as reference)
    for b, cols in enumerate(index):
        idx[b, :len(cols)] = np.asarray(cols, np.int32)
    mask = jnp.asarray(length_mask(nums, max_num))
    sub = cols_emb[jnp.arange(bS)[:, None], jnp.asarray(idx)]      # one gather
    return sub, mask


def get_token_embeddings(wemb_n, l_n, t_to_tt_idx):
    idx = pad_list(t_to_tt_idx, l_n)
    bS, max_l_n = idx.shape
    D = wemb_n.shape[-1]
    idx3 = jnp.broadcast_to(jnp.asarray(idx)[:, :, None], (bS, max_l_n, D))
    token_emb = jnp.take_along_axis(wemb_n, idx3, axis=1)
    return token_emb, jnp.asarray(length_mask(l_n, max_l_n))


def build_span_weights(g_tags, l_n, max_l_n):
    """Span-mean weights so get_val_embeddings is one batched matmul."""
    spans_all, nums = extract_val(g_tags, l_n)
    bS = len(l_n)
    V = max(max(nums), 1)
    w = np.zeros((bS, V, max_l_n), np.float32)
    vmask = np.zeros((bS, V), np.float32)
    for b, spans in enumerate(spans_all):
        for i, (s, e) in enumerate(spans):
            w[b, i, s:e + 1] = 1.0 / float(e - s + 1)
            vmask[b, i] = 1.0
    return jnp.asarray(w), jnp.asarray(vmask)


# ---------------------------------------------------------------------------
# Forward
# ---------------------------------------------------------------------------

def seq2sql_forward(params, fused, wemb_cls, wemb_n, l_n, wemb_hpu, l_hpu, l_hs,
                    t_to_tt_idx, g_sn, g_sc, g_wnop, g_wc, g_tags):
    bS, D = wemb_cls.shape

    # ---- kernel 1: column representation + W_select_col / W_where_col ------
    cols_emb, col_mask, s_sc, s_wc = get_columns_representation(
        fused, wemb_cls, wemb_hpu, l_hpu, l_hs)

    # gold labels drive control flow (pred_* are external; see TODO above)
    pr_sn, pr_sc, pr_wnop, pr_wc = g_sn, g_sc, g_wnop, g_wc
    pr_wn = [WNOP_MAP_REVERSE[nop][1] for nop in pr_wnop]

    selected_cols_emb, selected_cols_mask = get_sub_columns(cols_emb, pr_sc, pr_sn)
    where_cols_emb, where_cols_mask = get_sub_columns(cols_emb, pr_wc, pr_wn,
                                                      max_num=3)
    token_emb, nlu_mask = get_token_embeddings(wemb_n, l_n, t_to_tt_idx)

    # span means of token embeddings (vectorized get_val_embeddings)
    Ln = token_emb.shape[1]
    span_w, val_mask = build_span_weights(g_tags, l_n, Ln)
    val_emb = jnp.einsum("bvt,btd->bvd", span_w, token_emb)

    S = selected_cols_emb.shape[1]
    C = where_cols_emb.shape[1]          # == 3
    V = val_emb.shape[1]

    # ---- kernel 2: every remaining Linear head in ONE lane-dense matmul ----
    rows = jnp.concatenate([
        wemb_cls,                                  # [0 , o1): cls rows
        selected_cols_emb.reshape(bS * S, D),      # [o1, o2): selected columns
        where_cols_emb.reshape(bS * C, D),         # [o2, o3): where columns
        token_emb.reshape(bS * Ln, D),             # [o3, o4): NL tokens
        val_emb.reshape(bS * V, D),                # [o4, o5): value spans
    ], axis=0)
    heads = fused_heads(rows, fused["Wt"], fused["bt"], fused["st"])
    o1 = bS
    o2 = o1 + bS * S
    o3 = o2 + bS * C
    o4 = o3 + bS * Ln
    o5 = o4 + bS * V
    sl = fused["slices"]

    s_sn = heads[0:o1, sl["sn"][0]]
    s_wnop = heads[0:o1, sl["wnop"][0]:sl["wnop"][1]]
    s_sa = (heads[o1:o2, sl["sa"][0]:sl["sa"][1]].reshape(bS, S, 6)
            * selected_cols_mask[:, :, None])
    s_wo = heads[o2:o3, sl["wo"][0]:sl["wo"][1]].reshape(bS, C, 4)
    s_tags = heads[o3:o4, sl["tag"][0]].reshape(bS, Ln) * nlu_mask
    cols_m = heads[o2:o3, sl["mcol"][0]:sl["mcol"][1]].reshape(bS, C, D)
    vals_m = heads[o4:o5, sl["mval"][0]:sl["mval"][1]].reshape(bS, V, D)

    # ---- kernel 3: column / value cross match -------------------------------
    Wm, bm = params["W_cv_match"]
    s_match = pallas_cv_match(cols_m, vals_m, Wm, bm, where_cols_mask, val_mask)

    return s_sn, s_sc, s_sa, s_wnop, s_wc, s_wo, s_tags, s_match


# ---------------------------------------------------------------------------
# Example run
# ---------------------------------------------------------------------------

if __name__ == "__main__":
    params = init_params(0)
    fused = build_fused_params(params)

    bS = 2
    l_hs = [3, 2]            # columns per example
    T = sum(l_hs)            # total columns = 5
    L = 4                    # max column-token length
    l_hpu = [2, 3, 4, 1, 2]  # tokens per column
    l_n = [5, 4]             # NL token lengths
    max_subtok = 10
    t_to_tt_idx = [[0, 2, 3, 5, 7], [0, 1, 3, 4]]

    key = jax.random.PRNGKey(0)
    k1, k2, k3 = jax.random.split(key, 3)
    wemb_cls = jax.random.normal(k1, (bS, IS), jnp.float32)
    wemb_n = jax.random.normal(k2, (bS, max_subtok, IS), jnp.float32)
    wemb_hpu = jax.random.normal(k3, (T, L, IS), jnp.float32)

    # gold labels (so external pred_* functions are not needed)
    g_sn = [1, 2]
    g_sc = [[0], [0, 1]]
    g_wnop = [2, 1]            # -> pr_wn = [2, 1]
    g_wc = [[1, 2], [0]]
    g_tags = [[0, 1, 1, 0, 1], [1, 1, 0, 0]]

    outs = seq2sql_forward(
        params, fused, wemb_cls, wemb_n, l_n, wemb_hpu, l_hpu, l_hs,
        t_to_tt_idx, g_sn, g_sc, g_wnop, g_wc, g_tags,
    )
    jax.block_until_ready(outs)

    names = ["s_sn", "s_sc", "s_sa", "s_wnop", "s_wc", "s_wo", "s_tags",
             "s_match"]
    shapes = {"s_sn": (bS,), "s_sc": (bS, 3), "s_sa": (bS, 2, 6),
              "s_wnop": (bS, 7), "s_wc": (bS, 3), "s_wo": (bS, 3, 4),
              "s_tags": (bS, 5), "s_match": (bS, 3, 2)}
    for n, o in zip(names, outs):
        arr = np.asarray(o)
        assert arr.shape == shapes[n], (n, arr.shape)
        assert np.all(np.isfinite(arr)), n
    print("KERNEL_OK")
</pallas_src>

<mosaic_0001>
module attributes {stable_mosaic.version = 11 : i64} {
  func.func @_col_repr_kernel(%arg0: i32, %arg1: memref<5x4x32xf32, #tpu.memory_space<vmem>>, %arg2: memref<5x32xf32, #tpu.memory_space<vmem>>, %arg3: memref<5x4xf32, #tpu.memory_space<vmem>>, %arg4: memref<32x32xf32, #tpu.memory_space<vmem>>, %arg5: memref<1x32xf32, #tpu.memory_space<vmem>>, %arg6: memref<32x32xf32, #tpu.memory_space<vmem>>, %arg7: memref<1x32xf32, #tpu.memory_space<vmem>>, %arg8: memref<32x128xf32, #tpu.memory_space<vmem>>, %arg9: memref<1x128xf32, #tpu.memory_space<vmem>>, %arg10: memref<1x128xf32, #tpu.memory_space<vmem>>, %arg11: memref<5x128xf32, #tpu.memory_space<vmem>>) attributes {dimension_semantics = [#tpu.dimension_semantics<arbitrary>], iteration_bounds = array<i64: 1>, scalar_prefetch = 0 : i64, scratch_operands = 0 : i64, tpu.core_type = #tpu.core_type<tc>, window_params = [{pipeline_mode = #tpu.pipeline_mode<synchronous>, transform_indices = @transform_0, window_bounds = array<i64: 5, 4, 32>}, {pipeline_mode = #tpu.pipeline_mode<synchronous>, transform_indices = @transform_1, window_bounds = array<i64: 5, 32>}, {pipeline_mode = #tpu.pipeline_mode<synchronous>, transform_indices = @transform_2, window_bounds = array<i64: 5, 4>}, {pipeline_mode = #tpu.pipeline_mode<synchronous>, transform_indices = @transform_3, window_bounds = array<i64: 32, 32>}, {pipeline_mode = #tpu.pipeline_mode<synchronous>, transform_indices = @transform_4, window_bounds = array<i64: 1, 32>}, {pipeline_mode = #tpu.pipeline_mode<synchronous>, transform_indices = @transform_5, window_bounds = array<i64: 32, 32>}, {pipeline_mode = #tpu.pipeline_mode<synchronous>, transform_indices = @transform_6, window_bounds = array<i64: 1, 32>}, {pipeline_mode = #tpu.pipeline_mode<synchronous>, transform_indices = @transform_7, window_bounds = array<i64: 32, 128>}, {pipeline_mode = #tpu.pipeline_mode<synchronous>, transform_indices = @transform_8, window_bounds = array<i64: 1, 128>}, {pipeline_mode = #tpu.pipeline_mode<synchronous>, transform_indices = @transform_9, window_bounds = array<i64: 1, 128>}, {pipeline_mode = #tpu.pipeline_mode<synchronous>, transform_indices = @transform_10, window_bounds = array<i64: 5, 128>}]} {
    %c0 = arith.constant 0 : index
    %c0_0 = arith.constant 0 : index
    %c0_1 = arith.constant 0 : index
    %0 = vector.load %arg1[%c0, %c0_0, %c0_1] : memref<5x4x32xf32, #tpu.memory_space<vmem>>, vector<5x4x32xf32>
    %c0_2 = arith.constant 0 : index
    %c0_3 = arith.constant 0 : index
    %1 = vector.load %arg2[%c0_2, %c0_3] : memref<5x32xf32, #tpu.memory_space<vmem>>, vector<5x32xf32>
    %c0_4 = arith.constant 0 : index
    %c0_5 = arith.constant 0 : index
    %2 = vector.load %arg4[%c0_4, %c0_5] : memref<32x32xf32, #tpu.memory_space<vmem>>, vector<32x32xf32>
    %cst = arith.constant dense<0.000000e+00> : vector<5x32xf32>
    %3 = tpu.matmul %1, %2, %cst {dimension_numbers = #tpu.dot_dimension_numbers<[1], [0], [0], [1], [0, 0, 1, 1], [], []>} : vector<5x32xf32>, vector<32x32xf32>, vector<5x32xf32> -> vector<5x32xf32>
    %c0_6 = arith.constant 0 : index
    %c0_7 = arith.constant 0 : index
    %4 = vector.load %arg5[%c0_6, %c0_7] : memref<1x32xf32, #tpu.memory_space<vmem>>, vector<1x32xf32>
    %5 = vector.broadcast %4 : vector<1x32xf32> to vector<5x32xf32>
    %6 = arith.addf %3, %5 : vector<5x32xf32>
    %c0_8 = arith.constant 0 : index
    %c0_9 = arith.constant 0 : index
    %7 = vector.load %arg6[%c0_8, %c0_9] : memref<32x32xf32, #tpu.memory_space<vmem>>, vector<32x32xf32>
    %cst_10 = arith.constant dense<0.000000e+00> : vector<5x32xf32>
    %8 = tpu.matmul %6, %7, %cst_10 {dimension_numbers = #tpu.dot_dimension_numbers<[1], [0], [0], [1], [0, 0, 1, 1], [], []>} : vector<5x32xf32>, vector<32x32xf32>, vector<5x32xf32> -> vector<5x32xf32>
    %c0_11 = arith.constant 0 : index
    %c0_12 = arith.constant 0 : index
    %9 = vector.load %arg7[%c0_11, %c0_12] : memref<1x32xf32, #tpu.memory_space<vmem>>, vector<1x32xf32>
    %10 = vector.broadcast %9 : vector<1x32xf32> to vector<5x32xf32>
    %11 = arith.mulf %6, %10 : vector<5x32xf32>
    %cst_13 = arith.constant dense<0.000000e+00> : vector<5xf32>
    %12 = vector.multi_reduction <add>, %11, %cst_13 [1] : vector<5x32xf32> to vector<5xf32>
    %13 = vector.shape_cast %12 : vector<5xf32> to vector<5x1xf32>
    %14 = vector.shape_cast %8 : vector<5x32xf32> to vector<5x1x32xf32>
    %15 = vector.broadcast %14 : vector<5x1x32xf32> to vector<5x4x32xf32>
    %16 = arith.mulf %0, %15 : vector<5x4x32xf32>
    %cst_14 = arith.constant dense<0.000000e+00> : vector<5x4xf32>
    %17 = vector.multi_reduction <add>, %16, %cst_14 [2] : vector<5x4x32xf32> to vector<5x4xf32>
    %18 = vector.broadcast %13 : vector<5x1xf32> to vector<5x4xf32>
    %19 = arith.addf %17, %18 : vector<5x4xf32>
    %c0_15 = arith.constant 0 : index
    %c0_16 = arith.constant 0 : index
    %20 = vector.load %arg3[%c0_15, %c0_16] : memref<5x4xf32, #tpu.memory_space<vmem>>, vector<5x4xf32>
    %21 = arith.mulf %19, %20 : vector<5x4xf32>
    %cst_17 = arith.constant dense<0.000000e+00> : vector<5xf32>
    %22 = vector.multi_reduction <add>, %21, %cst_17 [1] : vector<5x4xf32> to vector<5xf32>
    %23 = vector.shape_cast %22 : vector<5xf32> to vector<5x1xf32>
    %24 = tpu.reciprocal %23 {approx = true} : vector<5x1xf32> -> vector<5x1xf32>
    %25 = vector.broadcast %24 : vector<5x1xf32> to vector<5x4xf32>
    %26 = arith.mulf %21, %25 : vector<5x4xf32>
    %27 = vector.shape_cast %26 : vector<5x4xf32> to vector<5x4x1xf32>
    %28 = vector.broadcast %27 : vector<5x4x1xf32> to vector<5x4x32xf32>
    %29 = arith.mulf %0, %28 : vector<5x4x32xf32>
    %cst_18 = arith.constant dense<0.000000e+00> : vector<5x32xf32>
    %30 = vector.multi_reduction <add>, %29, %cst_18 [1] : vector<5x4x32xf32> to vector<5x32xf32>
    %31 = arith.addf %30, %1 : vector<5x32xf32>
    %c0_19 = arith.constant 0 : index
    %c0_20 = arith.constant 0 : index
    %32 = vector.load %arg8[%c0_19, %c0_20] : memref<32x128xf32, #tpu.memory_space<vmem>>, vector<32x128xf32>
    %cst_21 = arith.constant dense<0.000000e+00> : vector<5x128xf32>
    %33 = tpu.matmul %31, %32, %cst_21 {dimension_numbers = #tpu.dot_dimension_numbers<[1], [0], [0], [1], [0, 0, 1, 1], [], []>} : vector<5x32xf32>, vector<32x128xf32>, vector<5x128xf32> -> vector<5x128xf32>
    %c0_22 = arith.constant 0 : index
    %c0_23 = arith.constant 0 : index
    %34 = vector.load %arg9[%c0_22, %c0_23] : memref<1x128xf32, #tpu.memory_space<vmem>>, vector<1x128xf32>
    %35 = vector.broadcast %34 : vector<1x128xf32> to vector<5x128xf32>
    %36 = arith.addf %33, %35 : vector<5x128xf32>
    %c0_24 = arith.constant 0 : index
    %c0_25 = arith.constant 0 : index
    %37 = vector.load %arg10[%c0_24, %c0_25] : memref<1x128xf32, #tpu.memory_space<vmem>>, vector<1x128xf32>
    %cst_26 = arith.constant 5.000000e-01 : f32
    %38 = vector.broadcast %cst_26 : f32 to vector<1x128xf32>
    %39 = arith.cmpf ogt, %37, %38 : vector<1x128xf32>
    %40 = arith.negf %36 : vector<5x128xf32>
    %41 = math.exp %40 : vector<5x128xf32>
    %cst_27 = arith.constant 1.000000e+00 : f32
    %42 = vector.broadcast %cst_27 : f32 to vector<5x128xf32>
    %43 = arith.addf %42, %41 : vector<5x128xf32>
    %44 = arith.divf %42, %43 : vector<5x128xf32>
    %45 = vector.shape_cast %39 : vector<1x128xi1> to vector<1x128xi1>
    %46 = vector.broadcast %45 : vector<1x128xi1> to vector<5x128xi1>
    %47 = arith.select %46, %44, %36 : vector<5x128xi1>, vector<5x128xf32>
    %c0_28 = arith.constant 0 : index
    %c0_29 = arith.constant 0 : index
    %48 = vector.load %arg11[%c0_28, %c0_29] : memref<5x128xf32, #tpu.memory_space<vmem>>, vector<5x128xf32>
    tpu.vector_store %arg11[%c0_28, %c0_29], %47 {strides = array<i32>} : memref<5x128xf32, #tpu.memory_space<vmem>>, vector<5x128xf32>,
    return
  }
  func.func @transform_0(%arg0: i32) -> (i32, i32, i32) {
    %c0_i32 = arith.constant 0 : i32
    %c0_i32_0 = arith.constant 0 : i32
    %c0_i32_1 = arith.constant 0 : i32
    %c0_i32_2 = arith.constant 0 : i32
    return %c0_i32, %c0_i32_0, %c0_i32_1 : i32, i32, i32
  }
  func.func @transform_1(%arg0: i32) -> (i32, i32) {
    %c0_i32 = arith.constant 0 : i32
    %c0_i32_0 = arith.constant 0 : i32
    %c0_i32_1 = arith.constant 0 : i32
    return %c0_i32, %c0_i32_0 : i32, i32
  }
  func.func @transform_2(%arg0: i32) -> (i32, i32) {
    %c0_i32 = arith.constant 0 : i32
    %c0_i32_0 = arith.constant 0 : i32
    %c0_i32_1 = arith.constant 0 : i32
    return %c0_i32, %c0_i32_0 : i32, i32
  }
  func.func @transform_3(%arg0: i32) -> (i32, i32) {
    %c0_i32 = arith.constant 0 : i32
    %c0_i32_0 = arith.constant 0 : i32
    %c0_i32_1 = arith.constant 0 : i32
    return %c0_i32, %c0_i32_0 : i32, i32
  }
  func.func @transform_4(%arg0: i32) -> (i32, i32) {
    %c0_i32 = arith.constant 0 : i32
    %c0_i32_0 = arith.constant 0 : i32
    %c0_i32_1 = arith.constant 0 : i32
    return %c0_i32, %c0_i32_0 : i32, i32
  }
  func.func @transform_5(%arg0: i32) -> (i32, i32) {
    %c0_i32 = arith.constant 0 : i32
    %c0_i32_0 = arith.constant 0 : i32
    %c0_i32_1 = arith.constant 0 : i32
    return %c0_i32, %c0_i32_0 : i32, i32
  }
  func.func @transform_6(%arg0: i32) -> (i32, i32) {
    %c0_i32 = arith.constant 0 : i32
    %c0_i32_0 = arith.constant 0 : i32
    %c0_i32_1 = arith.constant 0 : i32
    return %c0_i32, %c0_i32_0 : i32, i32
  }
  func.func @transform_7(%arg0: i32) -> (i32, i32) {
    %c0_i32 = arith.constant 0 : i32
    %c0_i32_0 = arith.constant 0 : i32
    %c0_i32_1 = arith.constant 0 : i32
    return %c0_i32, %c0_i32_0 : i32, i32
  }
  func.func @transform_8(%arg0: i32) -> (i32, i32) {
    %c0_i32 = arith.constant 0 : i32
    %c0_i32_0 = arith.constant 0 : i32
    %c0_i32_1 = arith.constant 0 : i32
    return %c0_i32, %c0_i32_0 : i32, i32
  }
  func.func @transform_9(%arg0: i32) -> (i32, i32) {
    %c0_i32 = arith.constant 0 : i32
    %c0_i32_0 = arith.constant 0 : i32
    %c0_i32_1 = arith.constant 0 : i32
    return %c0_i32, %c0_i32_0 : i32, i32
  }
  func.func @transform_10(%arg0: i32) -> (i32, i32) {
    %c0_i32 = arith.constant 0 : i32
    %c0_i32_0 = arith.constant 0 : i32
    %c0_i32_1 = arith.constant 0 : i32
    return %c0_i32, %c0_i32_0 : i32, i32
  }
}

</mosaic_0001>

<llo_original>
// kernel: tpu_custom_call.1
$region0: #{tpu_custom_call.1}
  #allocation0 [shape = 'u32[]', space=smem, size = 0x4, offset = 0x4, fixed_abs, tag = 'smem constant byte address 0x4 - core index']
  #allocation1 [shape = 'u32[144,128]{1,0:T(1,128)}', space=vmem, size = 0x12000, scoped, tag = 'internal scratch']
  %s0 = inlined_call_operand.hbm [shape: f32[5,4,32], index: 0, kind: input, shape index: {}]
  %s1 = inlined_call_operand.vmem [shape: f32[5,32], index: 1, kind: input, shape index: {}]
  %s2 = inlined_call_operand.vmem [shape: f32[5,4], index: 2, kind: input, shape index: {}]
  %s3 = inlined_call_operand.hbm [shape: f32[32,32], index: 3, kind: input, shape index: {}]
  %s4 = inlined_call_operand.vmem [shape: f32[1,32], index: 4, kind: input, shape index: {}]
  %s5 = inlined_call_operand.hbm [shape: f32[32,32], index: 5, kind: input, shape index: {}]
  %s6 = inlined_call_operand.vmem [shape: f32[1,32], index: 6, kind: input, shape index: {}]
  %s7 = inlined_call_operand.hbm [shape: f32[32,128], index: 7, kind: input, shape index: {}]
  %s8 = inlined_call_operand.vmem [shape: f32[1,128], index: 8, kind: input, shape index: {}]
  %s9 = inlined_call_operand.vmem [shape: f32[1,128], index: 9, kind: input, shape index: {}]
  %s10 = inlined_call_operand.hbm [shape: f32[5,128], index: 10, kind: output, shape index: {}]
  %s11 = sld [smem:[#allocation0]]
  $region66: #{tpu_custom_call.1} parent=0
    _
  %s13 = ssub.s32 1, %s11
  %s14 = scalar_select 0, %s13, %s11
  $region1: #{tpu_custom_call.1} parent=0
    #allocation2 [shape = 'u8[10240]{0}', space=vmem, size = 0x2800, scoped, tag = 'input window, operand 0, single buffered']
    #allocation3 [shape = 's32[1]{0}', space=sflag, size = 0x4, scoped, tag = 'scoped memory for tpu_custom_call.1']
    #allocation4 [shape = 's32[1]{0}', space=sflag, size = 0x4, scoped, tag = 'scoped memory for tpu_custom_call.1']
    #allocation5 [shape = 'u8[16384]{0}', space=vmem, size = 0x4000, scoped, tag = 'input window, operand 3, single buffered']
    #allocation6 [shape = 's32[1]{0}', space=sflag, size = 0x4, scoped, tag = 'scoped memory for tpu_custom_call.1']
    #allocation7 [shape = 'u8[16384]{0}', space=vmem, size = 0x4000, scoped, tag = 'input window, operand 5, single buffered']
    #allocation8 [shape = 'u8[16384]{0}', space=vmem, size = 0x4000, scoped, tag = 'input window, operand 7, single buffered']
    #allocation9 [shape = 's32[1]{0}', space=sflag, size = 0x4, scoped, tag = 'scoped memory for tpu_custom_call.1']
    #allocation10 [shape = 'u8[4096]{0}', space=vmem, size = 0x1000, scoped, tag = 'output window, operand 0, single buffered']
    %15 = vsyncpa [#allocation3], 0
    %16 = vsyncpa [#allocation6], 0
    %17 = vsyncpa [#allocation9], 0
    %18 = vsyncpa [#allocation4], 0
    // Predicated region
    $region2: #{tpu_custom_call.1} parent=1 // pred_check
      _
    $region3: #{tpu_custom_call.1} parent=1 // pred_check_branch
      %20 = sbr.rel (0) target = $region5
    $region4: #{tpu_custom_call.1} parent=1 // pred_region
      %s22 = ssub.s32 320, 320
      %23 = vsyncadd [#allocation3], %s22
      %s24 = sshll.u32 [#allocation2], 4
      %s25 = int_to_ptr.vmem [resolvable:$true] %s24
      %30 = dma.hbm_to_vmem [thread:$0]  %s0, 320, %s25, [#allocation3], 64, 64, 4
    $region5: #{tpu_custom_call.1} parent=1 // pred_fallthru
      _
    // Predicated region
    $region6: #{tpu_custom_call.1} parent=1 // pred_check
      _
    $region7: #{tpu_custom_call.1} parent=1 // pred_check_branch
      %32 = sbr.rel (0) target = $region9
    $region8: #{tpu_custom_call.1} parent=1 // pred_region
      _
    $region9: #{tpu_custom_call.1} parent=1 // pred_fallthru
      _
    // Predicated region
    $region10: #{tpu_custom_call.1} parent=1 // pred_check
      _
    $region11: #{tpu_custom_call.1} parent=1 // pred_check_branch
      %34 = sbr.rel (0) target = $region13
    $region12: #{tpu_custom_call.1} parent=1 // pred_region
      _
    $region13: #{tpu_custom_call.1} parent=1 // pred_fallthru
      _
    // Predicated region
    $region14: #{tpu_custom_call.1} parent=1 // pred_check
      _
    $region15: #{tpu_custom_call.1} parent=1 // pred_check_branch
      %36 = sbr.rel (0) target = $region17
    $region16: #{tpu_custom_call.1} parent=1 // pred_region
      %s38 = ssub.s32 512, 512
      %39 = vsyncadd [#allocation6], %s38
      %s40 = sshll.u32 [#allocation5], 4
      %s41 = int_to_ptr.vmem [resolvable:$true] %s40
      %46 = dma.hbm_to_vmem [thread:$0]  %s3, 512, %s41, [#allocation6], 128, 128, 8
    $region17: #{tpu_custom_call.1} parent=1 // pred_fallthru
      _
    // Predicated region
    $region18: #{tpu_custom_call.1} parent=1 // pred_check
      _
    $region19: #{tpu_custom_call.1} parent=1 // pred_check_branch
      %48 = sbr.rel (0) target = $region21
    $region20: #{tpu_custom_call.1} parent=1 // pred_region
      _
    $region21: #{tpu_custom_call.1} parent=1 // pred_fallthru
      _
    // Predicated region
    $region22: #{tpu_custom_call.1} parent=1 // pred_check
      _
    $region23: #{tpu_custom_call.1} parent=1 // pred_check_branch
      %50 = sbr.rel (0) target = $region25
    $region24: #{tpu_custom_call.1} parent=1 // pred_region
      %s52 = ssub.s32 512, 512
      %53 = vsyncadd [#allocation6], %s52
      %s54 = sshll.u32 [#allocation7], 4
      %s55 = int_to_ptr.vmem [resolvable:$true] %s54
      %60 = dma.hbm_to_vmem [thread:$0]  %s5, 512, %s55, [#allocation6], 128, 128, 8
    $region25: #{tpu_custom_call.1} parent=1 // pred_fallthru
      _
    // Predicated region
    $region26: #{tpu_custom_call.1} parent=1 // pred_check
      _
    $region27: #{tpu_custom_call.1} parent=1 // pred_check_branch
      %62 = sbr.rel (0) target = $region29
    $region28: #{tpu_custom_call.1} parent=1 // pred_region
      _
    $region29: #{tpu_custom_call.1} parent=1 // pred_fallthru
      _
    // Predicated region
    $region30: #{tpu_custom_call.1} parent=1 // pred_check
      _
    $region31: #{tpu_custom_call.1} parent=1 // pred_check_branch
      %64 = sbr.rel (0) target = $region33
    $region32: #{tpu_custom_call.1} parent=1 // pred_region
      %s66 = ssub.s32 512, 512
      %67 = vsyncadd [#allocation9], %s66
      %s68 = sshll.u32 [#allocation8], 4
      %s69 = int_to_ptr.vmem [resolvable:$true] %s68
      %74 = dma.hbm_to_vmem [thread:$0]  %s7, 512, %s69, [#allocation9], 128, 128, 8
    $region33: #{tpu_custom_call.1} parent=1 // pred_fallthru
      _
    // Predicated region
    $region34: #{tpu_custom_call.1} parent=1 // pred_check
      _
    $region35: #{tpu_custom_call.1} parent=1 // pred_check_branch
      %76 = sbr.rel (0) target = $region37
    $region36: #{tpu_custom_call.1} parent=1 // pred_region
      _
    $region37: #{tpu_custom_call.1} parent=1 // pred_fallthru
      _
    // Predicated region
    $region38: #{tpu_custom_call.1} parent=1 // pred_check
      _
    $region39: #{tpu_custom_call.1} parent=1 // pred_check_branch
      %78 = sbr.rel (0) target = $region41
    $region40: #{tpu_custom_call.1} parent=1 // pred_region
      _
    $region41: #{tpu_custom_call.1} parent=1 // pred_fallthru
      _
    // Predicated region
    $region42: #{tpu_custom_call.1} parent=1 // pred_check
      _
    $region43: #{tpu_custom_call.1} parent=1 // pred_check_branch
      %80 = sbr.rel (0) target = $region45
    $region44: #{tpu_custom_call.1} parent=1 // pred_region
      %81 = dma.done [#allocation3], 320
    $region45: #{tpu_custom_call.1} parent=1 // pred_fallthru
      _
    // Predicated region
    $region46: #{tpu_custom_call.1} parent=1 // pred_check
      _
    $region47: #{tpu_custom_call.1} parent=1 // pred_check_branch
      %83 = sbr.rel (0) target = $region49
    $region48: #{tpu_custom_call.1} parent=1 // pred_region
      %84 = dma.done [#allocation6], 512
    $region49: #{tpu_custom_call.1} parent=1 // pred_fallthru
      _
    // Predicated region
    $region50: #{tpu_custom_call.1} parent=1 // pred_check
      _
    $region51: #{tpu_custom_call.1} parent=1 // pred_check_branch
      %86 = sbr.rel (0) target = $region53
    $region52: #{tpu_custom_call.1} parent=1 // pred_region
      %87 = dma.done [#allocation6], 512
    $region53: #{tpu_custom_call.1} parent=1 // pred_fallthru
      _
    // Predicated region
    $region54: #{tpu_custom_call.1} parent=1 // pred_check
      _
    $region55: #{tpu_custom_call.1} parent=1 // pred_check_branch
      %89 = sbr.rel (0) target = $region57
    $region56: #{tpu_custom_call.1} parent=1 // pred_region
      %90 = dma.done [#allocation9], 512
    $region57: #{tpu_custom_call.1} parent=1 // pred_fallthru
      _
    %v91 = vld [vmem:[#allocation2] sm:$0xf]
    %v92 = vld [vmem:[#allocation2 + $0x4] sm:$0xf]
    %v93 = vld [vmem:[#allocation2 + $0x8] sm:$0xf]
    %v94 = vld [vmem:[#allocation2 + $0xc] sm:$0xf]
    %v95 = vld [vmem:[#allocation2 + $0x10] sm:$0xf]
    %v96 = vld [vmem:[%s1] sm:$0x1f]
    %v97 = vld [vmem:[#allocation5] sm:$0xff]
    %v98 = vld [vmem:[#allocation5 + $0x8] sm:$0xff]
    %v99 = vld [vmem:[#allocation5 + $0x10] sm:$0xff]
    %v100 = vld [vmem:[#allocation5 + $0x18] sm:$0xff]
    %v101 = vld [vmem:[%s4] sm:$0x1]
    %v103 = vlaneseq
    %v104 = vshrl.u32 %v103, 7
    %v105 = vsub.s32 0, %v104
    %v106 = vrot.slane %v101, %v105
    %vm108 = vcmask 261120
    %v110 = vsel %vm108, %v96, 0
    %112 = vmatprep.subr.mxu0 0.0
    %113 = vmatpush1.msra.mxu0 0.0
    %114 = vmatprep.subr.mxu0 0.0
    %115 = vmatpush1.msra.mxu0 0.0
    %116 = vmatprep.subr.mxu0 0.0
    %117 = vmatpush1.msra.mxu0 0.0
    %118 = vmatprep.subr.mxu0 0.0
    %119 = vmatpush1.msra.mxu0 0.0
    %120 = vmatprep.subr.mxu0 0.0
    %121 = vmatpush1.msra.mxu0 0.0
    %122 = vmatprep.subr.mxu0 0.0
    %123 = vmatpush1.msra.mxu0 0.0
    %124 = vmatprep.subr.mxu0 0.0
    %125 = vmatpush1.msra.mxu0 0.0
    %126 = vmatprep.subr.mxu0 0.0
    %127 = vmatpush1.msra.mxu0 0.0
    %128 = vmatprep.subr.mxu0 0.0
    %129 = vmatpush1.msra.mxu0 0.0
    %130 = vmatprep.subr.mxu0 0.0
    %131 = vmatpush1.msra.mxu0 0.0
    %132 = vmatprep.subr.mxu0 0.0
    %133 = vmatpush1.msra.mxu0 0.0
    %134 = vmatprep.subr.mxu0 0.0
    %135 = vmatpush1.msra.mxu0 0.0
    %136 = vmatprep.subr.mxu0 0.0
    %137 = vmatpush1.msra.mxu0 %v100
    %138 = vmatprep.subr.mxu0 0.0
    %139 = vmatpush1.msra.mxu0 %v99
    %140 = vmatprep.subr.mxu0 0.0
    %141 = vmatpush1.msra.mxu0 %v98
    %142 = vmatprep.subr.mxu0 0.0
    %143 = vmatpush1.msra.mxu0 %v97
    %144 = vmatprep.subr.mxu0 0.0
    %145 = vmatpush2.msra.mxu0 0.0
    %146 = vmatprep.subr.mxu0 0.0
    %147 = vmatpush2.msra.mxu0 0.0
    %148 = vmatprep.subr.mxu0 0.0
    %149 = vmatpush2.msra.mxu0 0.0
    %150 = vmatprep.subr.mxu0 0.0
    %151 = vmatpush2.msra.mxu0 0.0
    %152 = vmatprep.subr.mxu0 0.0
    %153 = vmatpush2.msra.mxu0 0.0
    %154 = vmatprep.subr.mxu0 0.0
    %155 = vmatpush2.msra.mxu0 0.0
    %156 = vmatprep.subr.mxu0 0.0
    %157 = vmatpush2.msra.mxu0 0.0
    %158 = vmatprep.subr.mxu0 0.0
    %159 = vmatpush2.msra.mxu0 0.0
    %160 = vmatprep.subr.mxu0 0.0
    %161 = vmatpush2.msra.mxu0 0.0
    %162 = vmatprep.subr.mxu0 0.0
    %163 = vmatpush2.msra.mxu0 0.0
    %164 = vmatprep.subr.mxu0 0.0
    %165 = vmatpush2.msra.mxu0 0.0
    %166 = vmatprep.subr.mxu0 0.0
    %167 = vmatpush2.msra.mxu0 0.0
    %168 = vmatprep.subr.mxu0 0.0
    %169 = vmatpush2.msra.mxu0 0.0
    %170 = vmatprep.subr.mxu0 0.0
    %171 = vmatpush2.msra.mxu0 0.0
    %172 = vmatprep.subr.mxu0 0.0
    %173 = vmatpush2.msra.mxu0 0.0
    %174 = vmatprep.subr.mxu0 0.0
    %175 = vmatpush2.msra.mxu0 0.0
    %176 = vmatprep.mubr.f32.mxu0 0.0
    %177 = vmatmul.mubr.f32.gmra.mxu0 %v110
    %v178 = vpop.f32.mrf.mxu0
    %v179 = vadd.f32 %v106, %v178
    %v180 = vpop.f32.mrf.mxu0
    %181 = vdwg.mxu0
    %v182 = vld [vmem:[#allocation7] sm:$0xff]
    %v183 = vld [vmem:[#allocation7 + $0x8] sm:$0xff]
    %v184 = vld [vmem:[#allocation7 + $0x10] sm:$0xff]
    %v185 = vld [vmem:[#allocation7 + $0x18] sm:$0xff]
    %v187 = vsel %vm108, %v179, 0
    %189 = vmatprep.subr.mxu0 0.0
    %190 = vmatpush1.msra.mxu0 0.0
    %191 = vmatprep.subr.mxu0 0.0
    %192 = vmatpush1.msra.mxu0 0.0
    %193 = vmatprep.subr.mxu0 0.0
    %194 = vmatpush1.msra.mxu0 0.0
    %195 = vmatprep.subr.mxu0 0.0
    %196 = vmatpush1.msra.mxu0 0.0
    %197 = vmatprep.subr.mxu0 0.0
    %198 = vmatpush1.msra.mxu0 0.0
    %199 = vmatprep.subr.mxu0 0.0
    %200 = vmatpush1.msra.mxu0 0.0
    %201 = vmatprep.subr.mxu0 0.0
    %202 = vmatpush1.msra.mxu0 0.0
    %203 = vmatprep.subr.mxu0 0.0
    %204 = vmatpush1.msra.mxu0 0.0
    %205 = vmatprep.subr.mxu0 0.0
    %206 = vmatpush1.msra.mxu0 0.0
    %207 = vmatprep.subr.mxu0 0.0
    %208 = vmatpush1.msra.mxu0 0.0
    %209 = vmatprep.subr.mxu0 0.0
    %210 = vmatpush1.msra.mxu0 0.0
    %211 = vmatprep.subr.mxu0 0.0
    %212 = vmatpush1.msra.mxu0 0.0
    %213 = vmatprep.subr.mxu0 0.0
    %214 = vmatpush1.msra.mxu0 %v185
    %215 = vmatprep.subr.mxu0 0.0
    %216 = vmatpush1.msra.mxu0 %v184
    %217 = vmatprep.subr.mxu0 0.0
    %218 = vmatpush1.msra.mxu0 %v183
    %219 = vmatprep.subr.mxu0 0.0
    %220 = vmatpush1.msra.mxu0 %v182
    %221 = vmatprep.subr.mxu0 0.0
    %222 = vmatpush2.msra.mxu0 0.0
    %223 = vmatprep.subr.mxu0 0.0
    %224 = vmatpush2.msra.mxu0 0.0
    %225 = vmatprep.subr.mxu0 0.0
    %226 = vmatpush2.msra.mxu0 0.0
    %227 = vmatprep.subr.mxu0 0.0
    %228 = vmatpush2.msra.mxu0 0.0
    %229 = vmatprep.subr.mxu0 0.0
    %230 = vmatpush2.msra.mxu0 0.0
    %231 = vmatprep.subr.mxu0 0.0
    %232 = vmatpush2.msra.mxu0 0.0
    %233 = vmatprep.subr.mxu0 0.0
    %234 = vmatpush2.msra.mxu0 0.0
    %235 = vmatprep.subr.mxu0 0.0
    %236 = vmatpush2.msra.mxu0 0.0
    %237 = vmatprep.subr.mxu0 0.0
    %238 = vmatpush2.msra.mxu0 0.0
    %239 = vmatprep.subr.mxu0 0.0
    %240 = vmatpush2.msra.mxu0 0.0
    %241 = vmatprep.subr.mxu0 0.0
    %242 = vmatpush2.msra.mxu0 0.0
    %243 = vmatprep.subr.mxu0 0.0
    %244 = vmatpush2.msra.mxu0 0.0
    %245 = vmatprep.subr.mxu0 0.0
    %246 = vmatpush2.msra.mxu0 0.0
    %247 = vmatprep.subr.mxu0 0.0
    %248 = vmatpush2.msra.mxu0 0.0
    %249 = vmatprep.subr.mxu0 0.0
    %250 = vmatpush2.msra.mxu0 0.0
    %251 = vmatprep.subr.mxu0 0.0
    %252 = vmatpush2.msra.mxu0 0.0
    %253 = vmatprep.mubr.f32.mxu0 0.0
    %254 = vmatmul.mubr.f32.gmra.mxu0 %v187
    %v255 = vpop.f32.mrf.mxu0
    %v256 = vadd.f32 0.0, %v255
    %v257 = vpop.f32.mrf.mxu0
    %258 = vdwg.mxu0
    %v259 = vld [vmem:[%s6] sm:$0x1]
    %v261 = vlaneseq
    %v262 = vshrl.u32 %v261, 7
    %v263 = vsub.s32 0, %v262
    %v264 = vrot.slane %v259, %v263
    %v266 = vmul.f32 %v179, %v264
    %vm267 = vcmask 258048
    %v268 = vsel %vm267, %v266, 0.0
    %269 = vadd.xlane.f32.xlu0 %v268
    %v270 = vpop.xlane.xlu0 %269
    %v272 = vcombine.high %v256, %v256
    %v274 = vunpack.c.l.s4 1966171168
    %v275 = vunpack.c.0.s8 %v274
    %v276 = vlaneseq
    %v277 = vshrl.u32 %v276, 7
    %v278 = vsub.s32 %v275, %v277
    %v279 = vrot.slane %v256, %v278
    %v281 = vunpack.c.l.s4 1966171168
    %v282 = vunpack.c.0.s8 %v281
    %v283 = vlaneseq
    %v284 = vshrl.u32 %v283, 7
    %v285 = vsub.s32 %v282, %v284
    %v286 = vrot.slane %v272, %v285
    %v287 = vcombine.high %v279, %v279
    %v289 = vunpack.c.l.s4 1966171168
    %v290 = vunpack.c.0.s8 %v289
    %v291 = vlaneseq
    %v292 = vshrl.u32 %v291, 7
    %v293 = vsub.s32 %v290, %v292
    %v294 = vrot.slane %v279, %v293
    %v296 = vunpack.c.l.s4 1966171168
    %v297 = vunpack.c.0.s8 %v296
    %v298 = vlaneseq
    %v299 = vshrl.u32 %v298, 7
    %v300 = vsub.s32 %v297, %v299
    %v301 = vrot.slane %v286, %v300
    %v303 = vunpack.c.l.s4 1966171168
    %v304 = vunpack.c.0.s8 %v303
    %v305 = vlaneseq
    %v306 = vshrl.u32 %v305, 7
    %v307 = vsub.s32 %v304, %v306
    %v308 = vrot.slane %v287, %v307
    %v309 = vcombine.high %v294, %v294
    %v310 = vcombine.high %v308, %v308
    %v311 = vlaneseq
    %v312 = vshrl.u32 %v311, 7
    %v313 = vsub.s32 0, %v312
    %v314 = vrot.slane %v294, %v313
    %v315 = vlaneseq
    %v316 = vshrl.u32 %v315, 7
    %v317 = vsub.s32 0, %v316
    %v318 = vrot.slane %v308, %v317
    %v319 = vlaneseq
    %v320 = vshrl.u32 %v319, 7
    %v321 = vsub.s32 0, %v320
    %v322 = vrot.slane %v309, %v321
    %v323 = vlaneseq
    %v324 = vshrl.u32 %v323, 7
    %v325 = vsub.s32 0, %v324
    %v326 = vrot.slane %v310, %v325
    %v327 = vlaneseq
    %v328 = vshrl.u32 %v327, 7
    %v329 = vsub.s32 0, %v328
    %v330 = vrot.slane %v301, %v329
    %v336 = vmul.f32 %v91, %v314
    %v337 = vmul.f32 %v92, %v318
    %v338 = vmul.f32 %v93, %v322
    %v339 = vmul.f32 %v94, %v326
    %v340 = vmul.f32 %v95, %v330
    %vm341 = vcmask 257024
    %v342 = vsel %vm341, %v336, 0.0
    %343 = vadd.xlane.f32.xlu0 %v342
    %v344 = vpop.xlane.xlu0 %343
    %v345 = vsel %vm341, %v337, 0.0
    %346 = vadd.xlane.f32.xlu0 %v345
    %v347 = vpop.xlane.xlu0 %346
    %v348 = vsel %vm341, %v338, 0.0
    %349 = vadd.xlane.f32.xlu0 %v348
    %v350 = vpop.xlane.xlu0 %349
    %v351 = vsel %vm341, %v339, 0.0
    %352 = vadd.xlane.f32.xlu0 %v351
    %v353 = vpop.xlane.xlu0 %352
    %v354 = vsel %vm341, %v340, 0.0
    %355 = vadd.xlane.f32.xlu0 %v354
    %v356 = vpop.xlane.xlu0 %355
    %v358 = vlaneseq
    %v359 = vshrl.u32 %v358, 7
    %v360 = vsub.s32 0, %v359
    %v361 = vrot.slane %v270, %v360
    %v362 = vlaneseq
    %v363 = vshrl.u32 %v362, 7
    %v364 = vsub.s32 1, %v363
    %v365 = vrot.slane %v270, %v364
    %v366 = vlaneseq
    %v367 = vshrl.u32 %v366, 7
    %v368 = vsub.s32 2, %v367
    %v369 = vrot.slane %v270, %v368
    %v370 = vlaneseq
    %v371 = vshrl.u32 %v370, 7
    %v372 = vsub.s32 3, %v371
    %v373 = vrot.slane %v270, %v372
    %v374 = vlaneseq
    %v375 = vshrl.u32 %v374, 7
    %v376 = vsub.s32 4, %v375
    %v377 = vrot.slane %v270, %v376
    %v383 = vadd.f32 %v344, %v361
    %v384 = vadd.f32 %v347, %v365
    %v385 = vadd.f32 %v350, %v369
    %v386 = vadd.f32 %v353, %v373
    %v387 = vadd.f32 %v356, %v377
    %v388 = vld [vmem:[%s2] sm:$0x1f]
    %v390 = vlaneseq
    %v391 = vshrl.u32 %v390, 7
    %v392 = vsub.s32 0, %v391
    %v393 = vrot.slane %v388, %v392
    %395 = vbcast.lane.b32.xlu0 %v393, 256
    %v396 = vpop.permute.xlu0 %395
    %v397 = vlaneseq
    %v398 = vshrl.u32 %v397, 7
    %v399 = vsub.s32 1, %v398
    %v400 = vrot.slane %v388, %v399
    %402 = vbcast.lane.b32.xlu0 %v400, 256
    %v403 = vpop.permute.xlu0 %402
    %v404 = vlaneseq
    %v405 = vshrl.u32 %v404, 7
    %v406 = vsub.s32 2, %v405
    %v407 = vrot.slane %v388, %v406
    %409 = vbcast.lane.b32.xlu0 %v407, 256
    %v410 = vpop.permute.xlu0 %409
    %v411 = vlaneseq
    %v412 = vshrl.u32 %v411, 7
    %v413 = vsub.s32 3, %v412
    %v414 = vrot.slane %v388, %v413
    %416 = vbcast.lane.b32.xlu0 %v414, 256
    %v417 = vpop.permute.xlu0 %416
    %v418 = vlaneseq
    %v419 = vshrl.u32 %v418, 7
    %v420 = vsub.s32 4, %v419
    %v421 = vrot.slane %v388, %v420
    %423 = vbcast.lane.b32.xlu0 %v421, 256
    %v424 = vpop.permute.xlu0 %423
    %v430 = vmul.f32 %v383, %v396
    %v431 = vmul.f32 %v384, %v403
    %v432 = vmul.f32 %v385, %v410
    %v433 = vmul.f32 %v386, %v417
    %v434 = vmul.f32 %v387, %v424
    %440 = vset.pattern.permute.xlu0 0
    %441 = vperm.xlu0 %440, %v430
    %v442 = vpop.permute.xlu0 %441
    %443 = vset.pattern.permute.xlu0 0
    %444 = vperm.xlu0 %443, %v431
    %v445 = vpop.permute.xlu0 %444
    %446 = vset.pattern.permute.xlu0 0
    %447 = vperm.xlu0 %446, %v432
    %v448 = vpop.permute.xlu0 %447
    %449 = vset.pattern.permute.xlu0 0
    %450 = vperm.xlu0 %449, %v433
    %v451 = vpop.permute.xlu0 %450
    %452 = vset.pattern.permute.xlu0 0
    %453 = vperm.xlu0 %452, %v434
    %v454 = vpop.permute.xlu0 %453
    %v455 = vlaneseq
    %v456 = vand.u32 %v455, 127
    %v457 = vlaneseq
    %v458 = vshrl.u32 %v457, 7
    %v459 = vsub.s32 %v456, %v458
    %v460 = vrot.slane %v442, %v459
    %v461 = vlaneseq
    %v462 = vshrl.u32 %v461, 7
    %v463 = vsub.s32 %v456, %v462
    %v464 = vrot.slane %v445, %v463
    %v465 = vlaneseq
    %v466 = vshrl.u32 %v465, 7
    %v467 = vsub.s32 %v456, %v466
    %v468 = vrot.slane %v448, %v467
    %v469 = vlaneseq
    %v470 = vshrl.u32 %v469, 7
    %v471 = vsub.s32 %v456, %v470
    %v472 = vrot.slane %v451, %v471
    %v473 = vlaneseq
    %v474 = vshrl.u32 %v473, 7
    %v475 = vsub.s32 %v456, %v474
    %v476 = vrot.slane %v454, %v475
    %vm477 = vcmask 1041409
    %v478 = vsel %vm477, %v464, %v460
    %vm479 = vcmask 1042434
    %v480 = vsel %vm479, %v468, %v478
    %vm481 = vcmask 1043459
    %v482 = vsel %vm481, %v472, %v480
    %vm483 = vcmask 1044484
    %v484 = vsel %vm483, %v476, %v482
    %vm486 = vcmask 28672
    %v487 = vsel %vm486, %v484, 0.0
    %488 = vadd.xlane.f32.xlu0 %v487
    %v489 = vpop.xlane.xlu0 %488
    %v490 = vrcp.pop %v489
    %v492 = vlaneseq
    %v493 = vshrl.u32 %v492, 7
    %v494 = vsub.s32 0, %v493
    %v495 = vrot.slane %v490, %v494
    %v496 = vlaneseq
    %v497 = vshrl.u32 %v496, 7
    %v498 = vsub.s32 1, %v497
    %v499 = vrot.slane %v490, %v498
    %v500 = vlaneseq
    %v501 = vshrl.u32 %v500, 7
    %v502 = vsub.s32 2, %v501
    %v503 = vrot.slane %v490, %v502
    %v504 = vlaneseq
    %v505 = vshrl.u32 %v504, 7
    %v506 = vsub.s32 3, %v505
    %v507 = vrot.slane %v490, %v506
    %v508 = vlaneseq
    %v509 = vshrl.u32 %v508, 7
    %v510 = vsub.s32 4, %v509
    %v511 = vrot.slane %v490, %v510
    %v517 = vmul.f32 %v430, %v495
    %v518 = vmul.f32 %v431, %v499
    %v519 = vmul.f32 %v432, %v503
    %v520 = vmul.f32 %v433, %v507
    %v521 = vmul.f32 %v434, %v511
    %523 = vset.pattern.permute.xlu0 0
    %524 = vperm.xlu0 %523, %v517
    %v525 = vpop.permute.xlu0 %524
    %528 = vset.pattern.permute.xlu0 0
    %529 = vperm.xlu0 %528, %v518
    %v530 = vpop.permute.xlu0 %529
    %533 = vset.pattern.permute.xlu0 0
    %534 = vperm.xlu0 %533, %v519
    %v535 = vpop.permute.xlu0 %534
    %538 = vset.pattern.permute.xlu0 0
    %539 = vperm.xlu0 %538, %v520
    %v540 = vpop.permute.xlu0 %539
    %543 = vset.pattern.permute.xlu0 0
    %544 = vperm.xlu0 %543, %v521
    %v545 = vpop.permute.xlu0 %544
    %v547 = vmul.f32 %v91, %v525
    %v548 = vmul.f32 %v92, %v530
    %v549 = vmul.f32 %v93, %v535
    %v550 = vmul.f32 %v94, %v540
    %v551 = vmul.f32 %v95, %v545
    %v552 = vsel %vm341, %v547, 0.0
    %v553 = vrot.slane %v552, 4
    %v554 = vadd.f32 %v552, %v553
    %v555 = vrot.slane %v554, 2
    %v556 = vadd.f32 %v554, %v555
    %v557 = vrot.slane %v556, 1
    %v558 = vadd.f32 %v556, %v557
    %v559 = vsel %vm341, %v548, 0.0
    %v560 = vrot.slane %v559, 4
    %v561 = vadd.f32 %v559, %v560
    %v562 = vrot.slane %v561, 2
    %v563 = vadd.f32 %v561, %v562
    %v564 = vrot.slane %v563, 1
    %v565 = vadd.f32 %v563, %v564
    %v566 = vsel %vm341, %v549, 0.0
    %v567 = vrot.slane %v566, 4
    %v568 = vadd.f32 %v566, %v567
    %v569 = vrot.slane %v568, 2
    %v570 = vadd.f32 %v568, %v569
    %v571 = vrot.slane %v570, 1
    %v572 = vadd.f32 %v570, %v571
    %v573 = vsel %vm341, %v550, 0.0
    %v574 = vrot.slane %v573, 4
    %v575 = vadd.f32 %v573, %v574
    %v576 = vrot.slane %v575, 2
    %v577 = vadd.f32 %v575, %v576
    %v578 = vrot.slane %v577, 1
    %v579 = vadd.f32 %v577, %v578
    %v580 = vsel %vm341, %v551, 0.0
    %v581 = vrot.slane %v580, 4
    %v582 = vadd.f32 %v580, %v581
    %v583 = vrot.slane %v582, 2
    %v584 = vadd.f32 %v582, %v583
    %v585 = vrot.slane %v584, 1
    %v586 = vadd.f32 %v584, %v585
    %v587 = vrot.slane %v96, 1
    %v588 = vrot.slane %v96, 2
    %v589 = vrot.slane %v96, 3
    %v590 = vrot.slane %v96, 4
    %v596 = vadd.f32 %v558, %v96
    %v597 = vadd.f32 %v565, %v587
    %v598 = vadd.f32 %v572, %v588
    %v599 = vadd.f32 %v579, %v589
    %v600 = vadd.f32 %v586, %v590
    %v601 = vld [vmem:[#allocation8] sm:$0xff]
    %v602 = vld [vmem:[#allocation8 + $0x8] sm:$0xff]
    %v603 = vld [vmem:[#allocation8 + $0x10] sm:$0xff]
    %v604 = vld [vmem:[#allocation8 + $0x18] sm:$0xff]
    %v605 = vld [vmem:[%s8] sm:$0x1]
    %v607 = vlaneseq
    %v608 = vshrl.u32 %v607, 7
    %v609 = vsub.s32 0, %v608
    %v610 = vrot.slane %v605, %v609
    %v617 = vrot.slane %v597, 7
    %v618 = vsel %vm477, %v617, %v596
    %v619 = vrot.slane %v598, 6
    %v620 = vsel %vm479, %v619, %v618
    %v621 = vrot.slane %v599, 5
    %v622 = vsel %vm481, %v621, %v620
    %v623 = vrot.slane %v600, 4
    %v624 = vsel %vm483, %v623, %v622
    %v625 = vsel %vm108, %v624, 0
    %627 = vmatprep.subr.mxu0 0.0
    %628 = vmatpush1.msra.mxu0 0.0
    %629 = vmatprep.subr.mxu0 0.0
    %630 = vmatpush1.msra.mxu0 0.0
    %631 = vmatprep.subr.mxu0 0.0
    %632 = vmatpush1.msra.mxu0 0.0
    %633 = vmatprep.subr.mxu0 0.0
    %634 = vmatpush1.msra.mxu0 0.0
    %635 = vmatprep.subr.mxu0 0.0
    %636 = vmatpush1.msra.mxu0 0.0
    %637 = vmatprep.subr.mxu0 0.0
    %638 = vmatpush1.msra.mxu0 0.0
    %639 = vmatprep.subr.mxu0 0.0
    %640 = vmatpush1.msra.mxu0 0.0
    %641 = vmatprep.subr.mxu0 0.0
    %642 = vmatpush1.msra.mxu0 0.0
    %643 = vmatprep.subr.mxu0 0.0
    %644 = vmatpush1.msra.mxu0 0.0
    %645 = vmatprep.subr.mxu0 0.0
    %646 = vmatpush1.msra.mxu0 0.0
    %647 = vmatprep.subr.mxu0 0.0
    %648 = vmatpush1.msra.mxu0 0.0
    %649 = vmatprep.subr.mxu0 0.0
    %650 = vmatpush1.msra.mxu0 0.0
    %651 = vmatprep.subr.mxu0 0.0
    %652 = vmatpush1.msra.mxu0 %v604
    %653 = vmatprep.subr.mxu0 0.0
    %654 = vmatpush1.msra.mxu0 %v603
    %655 = vmatprep.subr.mxu0 0.0
    %656 = vmatpush1.msra.mxu0 %v602
    %657 = vmatprep.subr.mxu0 0.0
    %658 = vmatpush1.msra.mxu0 %v601
    %659 = vmatprep.subr.mxu0 0.0
    %660 = vmatpush2.msra.mxu0 0.0
    %661 = vmatprep.subr.mxu0 0.0
    %662 = vmatpush2.msra.mxu0 0.0
    %663 = vmatprep.subr.mxu0 0.0
    %664 = vmatpush2.msra.mxu0 0.0
    %665 = vmatprep.subr.mxu0 0.0
    %666 = vmatpush2.msra.mxu0 0.0
    %667 = vmatprep.subr.mxu0 0.0
    %668 = vmatpush2.msra.mxu0 0.0
    %669 = vmatprep.subr.mxu0 0.0
    %670 = vmatpush2.msra.mxu0 0.0
    %671 = vmatprep.subr.mxu0 0.0
    %672 = vmatpush2.msra.mxu0 0.0
    %673 = vmatprep.subr.mxu0 0.0
    %674 = vmatpush2.msra.mxu0 0.0
    %675 = vmatprep.subr.mxu0 0.0
    %676 = vmatpush2.msra.mxu0 0.0
    %677 = vmatprep.subr.mxu0 0.0
    %678 = vmatpush2.msra.mxu0 0.0
    %679 = vmatprep.subr.mxu0 0.0
    %680 = vmatpush2.msra.mxu0 0.0
    %681 = vmatprep.subr.mxu0 0.0
    %682 = vmatpush2.msra.mxu0 0.0
    %683 = vmatprep.subr.mxu0 0.0
    %684 = vmatpush2.msra.mxu0 0.0
    %685 = vmatprep.subr.mxu0 0.0
    %686 = vmatpush2.msra.mxu0 0.0
    %687 = vmatprep.subr.mxu0 0.0
    %688 = vmatpush2.msra.mxu0 0.0
    %689 = vmatprep.subr.mxu0 0.0
    %690 = vmatpush2.msra.mxu0 0.0
    %691 = vmatprep.mubr.f32.mxu0 0.0
    %692 = vmatmul.mubr.f32.gmra.mxu0 %v625
    %v693 = vpop.f32.mrf.mxu0
    %v694 = vadd.f32 %v610, %v693
    %v695 = vpop.f32.mrf.mxu0
    %696 = vdwg.mxu0
    %v697 = vld [vmem:[%s9] sm:$0x1]
    %vm698 = vcmp.gt.f32.partialorder %v697, 0.5
    %v699 = vxor.u32 %v694, 2147483648
    %v700 = vmul.f32 %v699, 1.442695
    %v701 = vpow.pop %v700
    %v702 = vadd.f32 %v701, 1.0
    %v703 = vrcp.pop %v702
    %v704 = vmul.f32 1.0, %v703
    %v705 = vsel %vm698, 1, 0
    %v706 = vlaneseq
    %v707 = vshrl.u32 %v706, 7
    %v708 = vsub.s32 0, %v707
    %v709 = vrot.slane %v705, %v708
    %vm710 = vcmp.eq.s32.totalorder %v709, 1
    %v711 = vsel %vm710, %v704, %v694
    %712 = vst [vmem:[#allocation10] sm:$0x1f] %v711
    // Predicated region
    $region58: #{tpu_custom_call.1} parent=1 // pred_check
      _
    $region59: #{tpu_custom_call.1} parent=1 // pred_check_branch
      %714 = sbr.rel (0) target = $region61
    $region60: #{tpu_custom_call.1} parent=1 // pred_region
      %s716 = ssub.s32 128, 128
      %717 = vsyncadd [#allocation4], %s716
      %s719 = sshll.u32 [#allocation10], 4
      %s720 = int_to_ptr.vmem [resolvable:$true] %s719
      %722 = dma.vmem_to_hbm [thread:$0]  %s720, 128, %s10, [#allocation4]
    $region61: #{tpu_custom_call.1} parent=1 // pred_fallthru
      _
    // Predicated region
    $region62: #{tpu_custom_call.1} parent=1 // pred_check
      _
    $region63: #{tpu_custom_call.1} parent=1 // pred_check_branch
      %724 = sbr.rel (0) target = $region65
    $region64: #{tpu_custom_call.1} parent=1 // pred_region
      %725 = dma.done [#allocation4], 128
    $region65: #{tpu_custom_call.1} parent=1 // pred_fallthru
      _
    %726 = vsyncpa [#allocation3], 1
    %727 = vsyncpa [#allocation6], 1
    %728 = vsyncpa [#allocation9], 1
    %729 = vsyncpa [#allocation4], 1

</llo_original>
